<compile_context>
chip_gen: v7x
topology: tpu7x:2x2x1
jax: 0.10.0
libtpu: 0.0.40
codegen_flags: <defaults>
</compile_context>

<pallas_src>
import functools
import math

import jax
import jax.numpy as jnp
from jax import lax
from jax.experimental import pallas as pl
from jax.experimental.pallas import tpu as pltpu


def _resblock_kernel(x_ref, w1_ref, w2_ref, o_ref, xpad_ref, im2_ref, *,
                     H, W, K, d1, d2, halo, neg_slope):
    """Fused ResnetBlock for one packed batch group, lane-dense (GC, HW) layout.

    x_ref   : (1, GC, HW)          packed input (G images stacked on channels),
                                   also the residual source
    w*_ref  : (GC, K*K*GC + 1)     per-tap block-diagonal weights + bias column
    o_ref   : (1, GC, HW)          output
    xpad_ref: (GC, HW + 2*halo)    VMEM scratch: halo-padded flattened image
    im2_ref : (K*K*GC + 1, HW)     VMEM scratch: im2col matrix (+ ones row)
    """
    GC = o_ref.shape[1]
    HW = H * W
    off = (K - 1) // 2
    KKGC = K * K * GC

    # Scratch init.  Done unconditionally (3 tiny stores) so the kernel stays
    # correct even if the batch-group grid axis gets sharded across cores;
    # with the collapsed grid this runs exactly once anyway.
    xpad_ref[:, 0:halo] = jnp.zeros((GC, halo), jnp.float32)
    xpad_ref[:, halo + HW:] = jnp.zeros((GC, halo), jnp.float32)
    im2_ref[KKGC:KKGC + 1, :] = jnp.ones((1, HW), jnp.float32)   # bias row

    # Column index of each flattened pixel (built once, reused by both convs).
    col = lax.broadcasted_iota(jnp.int32, (GC, HW), 1) % W

    def conv(inp, w_ref, d):
        # inp: (GC, HW) f32.  Builds the im2col matrix in VMEM and performs a
        # single (GC, KKGC+1) x (KKGC+1, HW) MXU matmul (bias folded in).
        xpad_ref[:, halo:halo + HW] = inp          # 128-aligned interior store
        mask_pos = col < (W - d)                   # valid lanes for sx = +d
        mask_neg = col >= d                        # valid lanes for sx = -d
        t = 0
        for i in range(K):
            sy = (i - off) * d
            for j in range(K):
                sx = (j - off) * d
                s = sy * W + sx
                # Shift by s via a static lane-slice of the haloed scratch;
                # out-of-image rows land in the zero halo.
                tap = xpad_ref[:, halo + s:halo + s + HW]
                if sx > 0:                         # mask column wrap-around
                    tap = jnp.where(mask_pos, tap, 0.0)
                elif sx < 0:
                    tap = jnp.where(mask_neg, tap, 0.0)
                im2_ref[t * GC:(t + 1) * GC, :] = tap   # 8-row aligned store
                t += 1
        return jnp.dot(w_ref[...], im2_ref[...],
                       preferred_element_type=jnp.float32)

    x = x_ref[0].astype(jnp.float32)               # (GC, HW)
    h = conv(x, w1_ref, d1)
    h = jnp.where(h > 0.0, h, neg_slope * h)       # LeakyReLU(neg_slope)
    y = conv(h, w2_ref, d2) + x                    # residual add
    o_ref[0] = y.astype(o_ref.dtype)


def _prep_weight(w, b, G, C, K):
    """OIHW weight + bias -> 2-D (G*C, K*K*G*C + 1) im2col weight tile.

    Row = g*C + co; column = t*(G*C) + g'*C + ci, with a per-tap block-diagonal
    structure over the G packed images and the bias as the last column.
    """
    wt = jnp.transpose(w, (2, 3, 0, 1)).reshape(K * K, C, C)       # (t, co, ci)
    eye_g = jnp.eye(G, dtype=jnp.float32)
    # big[g, co, t, g', ci] = eye[g, g'] * wt[t, co, ci]
    big = (eye_g[:, None, None, :, None] *
           jnp.transpose(wt, (1, 0, 2))[None, :, :, None, :])
    big = big.reshape(G * C, K * K * G * C)
    bias_col = jnp.tile(b.reshape(C, 1), (G, 1))                    # (G*C, 1)
    return jnp.concatenate([big, bias_col], axis=1).astype(jnp.float32)


def resnet_block(x, w1, b1, w2, b2, dilation, negative_slope=0.0):
    """out = conv2(LeakyReLU(conv1(x))) + x.

    x: (N, C, H, W) NCHW; w1, w2: (C, C, K, K) OIHW (PyTorch layout); b1, b2: (C,).
    """
    N, C, H, W = x.shape
    K = w1.shape[2]
    HW = H * W
    off = (K - 1) // 2
    d1, d2 = int(dilation[0]), int(dilation[1])

    # Pack G images along the sublane (channel) axis so one grid step fills
    # all 8 sublanes and the small batch collapses to a single invocation.
    G = math.gcd(N, max(1, 8 // C))
    NB = N // G
    GC = G * C
    KKGC1 = K * K * GC + 1

    # Halo large enough for the largest flattened shift, rounded up to 128
    # lanes so the interior store into the scratch is vreg-aligned.
    max_shift = off * max(d1, d2) * (W + 1)
    halo = ((max_shift + 127) // 128) * 128

    x2 = x.reshape(NB, GC, HW)                     # free reshape, stays NCHW

    w1t = _prep_weight(w1, b1, G, C, K)
    w2t = _prep_weight(w2, b2, G, C, K)

    kern = functools.partial(_resblock_kernel, H=H, W=W, K=K, d1=d1, d2=d2,
                             halo=halo, neg_slope=float(negative_slope))

    out2 = pl.pallas_call(
        kern,
        out_shape=jax.ShapeDtypeStruct((NB, GC, HW), x.dtype),
        grid_spec=pltpu.PrefetchScalarGridSpec(
            num_scalar_prefetch=0,
            grid=(NB,),
            in_specs=[
                pl.BlockSpec((1, GC, HW), lambda n: (n, 0, 0)),
                pl.BlockSpec((GC, KKGC1), lambda n: (0, 0)),
                pl.BlockSpec((GC, KKGC1), lambda n: (0, 0)),
            ],
            out_specs=pl.BlockSpec((1, GC, HW), lambda n: (n, 0, 0)),
            scratch_shapes=[
                pltpu.VMEM((GC, HW + 2 * halo), jnp.float32),   # haloed image
                pltpu.VMEM((KKGC1, HW), jnp.float32),           # im2col matrix
            ],
        ),
        compiler_params=pltpu.CompilerParams(
            dimension_semantics=("parallel",)),
    )(x2, w1t, w2t)
    return out2.reshape(N, C, H, W)


def _reference(x, w1, b1, w2, b2, dilation, negative_slope=0.0):
    """Pure-JAX reference (NCHW / OIHW), mirroring the PyTorch module."""
    def conv(inp, w, b, d):
        k = w.shape[2]
        p = (k - 1) // 2 * d
        out = lax.conv_general_dilated(
            inp, w, window_strides=(1, 1),
            padding=[(p, p), (p, p)], rhs_dilation=(d, d),
            dimension_numbers=("NCHW", "OIHW", "NCHW"))
        return out + b[None, :, None, None]
    h = conv(x, w1, b1, dilation[0])
    h = jnp.where(h > 0.0, h, negative_slope * h)
    return conv(h, w2, b2, dilation[1]) + x


if __name__ == "__main__":
    # ResnetBlock(in_channels=4, kernel_size=3, dilation=(1, 2), bias=True)
    N, C, H, W = 2, 4, 16, 16
    K = 3
    dilation = (1, 2)
    NEG_SLOPE = 0.0           # nn.LeakyReLU(0.0) in the module

    key = jax.random.PRNGKey(0)
    kx, k1, k2, kb1, kb2 = jax.random.split(key, 5)

    x = jax.random.normal(kx, (N, C, H, W), jnp.float32)
    scale = 1.0 / jnp.sqrt(C * K * K)
    w1 = jax.random.uniform(k1, (C, C, K, K), jnp.float32, -scale, scale)   # OIHW
    w2 = jax.random.uniform(k2, (C, C, K, K), jnp.float32, -scale, scale)
    b1 = jax.random.uniform(kb1, (C,), jnp.float32, -scale, scale)
    b2 = jax.random.uniform(kb2, (C,), jnp.float32, -scale, scale)

    out = resnet_block(x, w1, b1, w2, b2, dilation, NEG_SLOPE)
    out = jax.block_until_ready(out)

    ref = _reference(x, w1, b1, w2, b2, dilation, NEG_SLOPE)
    assert out.shape == (N, C, H, W)
    assert jnp.allclose(out, ref, atol=1e-3, rtol=1e-3), "mismatch vs reference"

    print("KERNEL_OK")
</pallas_src>

<mosaic_0001>
module attributes {stable_mosaic.version = 11 : i64} {
  func.func @_resblock_kernel(%arg0: i32, %arg1: memref<1x8x256xf32, #tpu.memory_space<vmem>>, %arg2: memref<8x73xf32, #tpu.memory_space<vmem>>, %arg3: memref<8x73xf32, #tpu.memory_space<vmem>>, %arg4: memref<1x8x256xf32, #tpu.memory_space<vmem>>, %arg5: memref<8x512xf32, #tpu.memory_space<vmem>>, %arg6: memref<73x256xf32, #tpu.memory_space<vmem>>) attributes {dimension_semantics = [#tpu.dimension_semantics<parallel>], iteration_bounds = array<i64: 1>, scalar_prefetch = 0 : i64, scratch_operands = 2 : i64, tpu.core_type = #tpu.core_type<tc>, window_params = [{transform_indices = @transform_0, window_bounds = array<i64: 1, 8, 256>}, {pipeline_mode = #tpu.pipeline_mode<synchronous>, transform_indices = @transform_1, window_bounds = array<i64: 8, 73>}, {pipeline_mode = #tpu.pipeline_mode<synchronous>, transform_indices = @transform_2, window_bounds = array<i64: 8, 73>}, {transform_indices = @transform_3, window_bounds = array<i64: 1, 8, 256>}]} {
    %cst = arith.constant 0.000000e+00 : f32
    %0 = vector.broadcast %cst : f32 to vector<8x128xf32>
    %c0 = arith.constant 0 : index
    %c0_0 = arith.constant 0 : index
    %1 = vector.load %arg5[%c0, %c0_0] : memref<8x512xf32, #tpu.memory_space<vmem>>, vector<8x128xf32>
    tpu.vector_store %arg5[%c0, %c0_0], %0 {strides = array<i32>} : memref<8x512xf32, #tpu.memory_space<vmem>>, vector<8x128xf32>,
    %cst_1 = arith.constant 0.000000e+00 : f32
    %2 = vector.broadcast %cst_1 : f32 to vector<8x128xf32>
    %c0_2 = arith.constant 0 : index
    %c384 = arith.constant 384 : index
    %3 = vector.load %arg5[%c0_2, %c384] : memref<8x512xf32, #tpu.memory_space<vmem>>, vector<8x128xf32>
    tpu.vector_store %arg5[%c0_2, %c384], %2 {strides = array<i32>} : memref<8x512xf32, #tpu.memory_space<vmem>>, vector<8x128xf32>,
    %cst_3 = arith.constant 1.000000e+00 : f32
    %4 = vector.broadcast %cst_3 : f32 to vector<1x256xf32>
    %c72 = arith.constant 72 : index
    %c0_4 = arith.constant 0 : index
    %5 = vector.load %arg6[%c72, %c0_4] : memref<73x256xf32, #tpu.memory_space<vmem>>, vector<1x256xf32>
    tpu.vector_store %arg6[%c72, %c0_4], %4 {strides = array<i32>} : memref<73x256xf32, #tpu.memory_space<vmem>>, vector<1x256xf32>,
    %6 = tpu.iota {dimensions = array<i32: 1>} : vector<8x256xi32>
    %c16_i32 = arith.constant 16 : i32
    %c0_i32 = arith.constant 0 : i32
    %7 = arith.cmpi eq, %c16_i32, %c0_i32 : i32
    %c1_i32 = arith.constant 1 : i32
    %8 = arith.select %7, %c1_i32, %c16_i32 : i32
    %9 = vector.broadcast %8 : i32 to vector<8x256xi32>
    %10 = arith.remsi %6, %9 : vector<8x256xi32>
    %c0_i32_5 = arith.constant 0 : i32
    %11 = vector.broadcast %c0_i32_5 : i32 to vector<8x256xi32>
    %12 = arith.cmpi ne, %10, %11 : vector<8x256xi32>
    %c0_i32_6 = arith.constant 0 : i32
    %13 = vector.broadcast %c0_i32_6 : i32 to vector<8x256xi32>
    %14 = arith.cmpi slt, %10, %13 : vector<8x256xi32>
    %c0_i32_7 = arith.constant 0 : i32
    %15 = arith.cmpi slt, %8, %c0_i32_7 : i32
    %16 = vector.broadcast %15 : i1 to vector<8x256xi1>
    %17 = vector.broadcast %16 : vector<8x256xi1> to vector<8x256xi1>
    %18 = arith.xori %14, %17 : vector<8x256xi1>
    %19 = arith.andi %18, %12 : vector<8x256xi1>
    %20 = vector.broadcast %8 : i32 to vector<8x256xi32>
    %21 = arith.addi %10, %20 : vector<8x256xi32>
    %22 = arith.select %19, %21, %10 : vector<8x256xi1>, vector<8x256xi32>
    %c0_8 = arith.constant 0 : index
    %c0_9 = arith.constant 0 : index
    %c0_10 = arith.constant 0 : index
    %23 = vector.load %arg1[%c0_8, %c0_9, %c0_10] : memref<1x8x256xf32, #tpu.memory_space<vmem>>, vector<1x8x256xf32>
    %24 = vector.shape_cast %23 : vector<1x8x256xf32> to vector<8x256xf32>
    %c0_11 = arith.constant 0 : index
    %c128 = arith.constant 128 : index
    %25 = vector.load %arg5[%c0_11, %c128] : memref<8x512xf32, #tpu.memory_space<vmem>>, vector<8x256xf32>
    tpu.vector_store %arg5[%c0_11, %c128], %24 {strides = array<i32>} : memref<8x512xf32, #tpu.memory_space<vmem>>, vector<8x256xf32>,
    %c15_i32 = arith.constant 15 : i32
    %26 = vector.broadcast %c15_i32 : i32 to vector<8x256xi32>
    %27 = arith.cmpi slt, %22, %26 : vector<8x256xi32>
    %c1_i32_12 = arith.constant 1 : i32
    %28 = vector.broadcast %c1_i32_12 : i32 to vector<8x256xi32>
    %29 = arith.cmpi sge, %22, %28 : vector<8x256xi32>
    %c0_13 = arith.constant 0 : index
    %c111 = arith.constant 111 : index
    %30 = vector.load %arg5[%c0_13, %c111] : memref<8x512xf32, #tpu.memory_space<vmem>>, vector<8x256xf32>
    %cst_14 = arith.constant 0.000000e+00 : f32
    %31 = vector.broadcast %cst_14 : f32 to vector<8x256xf32>
    %32 = arith.select %29, %30, %31 : vector<8x256xi1>, vector<8x256xf32>
    %c0_15 = arith.constant 0 : index
    %c0_16 = arith.constant 0 : index
    %33 = vector.load %arg6[%c0_15, %c0_16] : memref<73x256xf32, #tpu.memory_space<vmem>>, vector<8x256xf32>
    tpu.vector_store %arg6[%c0_15, %c0_16], %32 {strides = array<i32>} : memref<73x256xf32, #tpu.memory_space<vmem>>, vector<8x256xf32>,
    %c0_17 = arith.constant 0 : index
    %c112 = arith.constant 112 : index
    %34 = vector.load %arg5[%c0_17, %c112] : memref<8x512xf32, #tpu.memory_space<vmem>>, vector<8x256xf32>
    %c8 = arith.constant 8 : index
    %c0_18 = arith.constant 0 : index
    %35 = vector.load %arg6[%c8, %c0_18] : memref<73x256xf32, #tpu.memory_space<vmem>>, vector<8x256xf32>
    tpu.vector_store %arg6[%c8, %c0_18], %34 {strides = array<i32>} : memref<73x256xf32, #tpu.memory_space<vmem>>, vector<8x256xf32>,
    %c0_19 = arith.constant 0 : index
    %c113 = arith.constant 113 : index
    %36 = vector.load %arg5[%c0_19, %c113] : memref<8x512xf32, #tpu.memory_space<vmem>>, vector<8x256xf32>
    %cst_20 = arith.constant 0.000000e+00 : f32
    %37 = vector.broadcast %cst_20 : f32 to vector<8x256xf32>
    %38 = arith.select %27, %36, %37 : vector<8x256xi1>, vector<8x256xf32>
    %c16 = arith.constant 16 : index
    %c0_21 = arith.constant 0 : index
    %39 = vector.load %arg6[%c16, %c0_21] : memref<73x256xf32, #tpu.memory_space<vmem>>, vector<8x256xf32>
    tpu.vector_store %arg6[%c16, %c0_21], %38 {strides = array<i32>} : memref<73x256xf32, #tpu.memory_space<vmem>>, vector<8x256xf32>,
    %c0_22 = arith.constant 0 : index
    %c127 = arith.constant 127 : index
    %40 = vector.load %arg5[%c0_22, %c127] : memref<8x512xf32, #tpu.memory_space<vmem>>, vector<8x256xf32>
    %cst_23 = arith.constant 0.000000e+00 : f32
    %41 = vector.broadcast %cst_23 : f32 to vector<8x256xf32>
    %42 = arith.select %29, %40, %41 : vector<8x256xi1>, vector<8x256xf32>
    %c24 = arith.constant 24 : index
    %c0_24 = arith.constant 0 : index
    %43 = vector.load %arg6[%c24, %c0_24] : memref<73x256xf32, #tpu.memory_space<vmem>>, vector<8x256xf32>
    tpu.vector_store %arg6[%c24, %c0_24], %42 {strides = array<i32>} : memref<73x256xf32, #tpu.memory_space<vmem>>, vector<8x256xf32>,
    %c0_25 = arith.constant 0 : index
    %c128_26 = arith.constant 128 : index
    %44 = vector.load %arg5[%c0_25, %c128_26] : memref<8x512xf32, #tpu.memory_space<vmem>>, vector<8x256xf32>
    %c32 = arith.constant 32 : index
    %c0_27 = arith.constant 0 : index
    %45 = vector.load %arg6[%c32, %c0_27] : memref<73x256xf32, #tpu.memory_space<vmem>>, vector<8x256xf32>
    tpu.vector_store %arg6[%c32, %c0_27], %44 {strides = array<i32>} : memref<73x256xf32, #tpu.memory_space<vmem>>, vector<8x256xf32>,
    %c0_28 = arith.constant 0 : index
    %c129 = arith.constant 129 : index
    %46 = vector.load %arg5[%c0_28, %c129] : memref<8x512xf32, #tpu.memory_space<vmem>>, vector<8x256xf32>
    %cst_29 = arith.constant 0.000000e+00 : f32
    %47 = vector.broadcast %cst_29 : f32 to vector<8x256xf32>
    %48 = arith.select %27, %46, %47 : vector<8x256xi1>, vector<8x256xf32>
    %c40 = arith.constant 40 : index
    %c0_30 = arith.constant 0 : index
    %49 = vector.load %arg6[%c40, %c0_30] : memref<73x256xf32, #tpu.memory_space<vmem>>, vector<8x256xf32>
    tpu.vector_store %arg6[%c40, %c0_30], %48 {strides = array<i32>} : memref<73x256xf32, #tpu.memory_space<vmem>>, vector<8x256xf32>,
    %c0_31 = arith.constant 0 : index
    %c143 = arith.constant 143 : index
    %50 = vector.load %arg5[%c0_31, %c143] : memref<8x512xf32, #tpu.memory_space<vmem>>, vector<8x256xf32>
    %cst_32 = arith.constant 0.000000e+00 : f32
    %51 = vector.broadcast %cst_32 : f32 to vector<8x256xf32>
    %52 = arith.select %29, %50, %51 : vector<8x256xi1>, vector<8x256xf32>
    %c48 = arith.constant 48 : index
    %c0_33 = arith.constant 0 : index
    %53 = vector.load %arg6[%c48, %c0_33] : memref<73x256xf32, #tpu.memory_space<vmem>>, vector<8x256xf32>
    tpu.vector_store %arg6[%c48, %c0_33], %52 {strides = array<i32>} : memref<73x256xf32, #tpu.memory_space<vmem>>, vector<8x256xf32>,
    %c0_34 = arith.constant 0 : index
    %c144 = arith.constant 144 : index
    %54 = vector.load %arg5[%c0_34, %c144] : memref<8x512xf32, #tpu.memory_space<vmem>>, vector<8x256xf32>
    %c56 = arith.constant 56 : index
    %c0_35 = arith.constant 0 : index
    %55 = vector.load %arg6[%c56, %c0_35] : memref<73x256xf32, #tpu.memory_space<vmem>>, vector<8x256xf32>
    tpu.vector_store %arg6[%c56, %c0_35], %54 {strides = array<i32>} : memref<73x256xf32, #tpu.memory_space<vmem>>, vector<8x256xf32>,
    %c0_36 = arith.constant 0 : index
    %c145 = arith.constant 145 : index
    %56 = vector.load %arg5[%c0_36, %c145] : memref<8x512xf32, #tpu.memory_space<vmem>>, vector<8x256xf32>
    %cst_37 = arith.constant 0.000000e+00 : f32
    %57 = vector.broadcast %cst_37 : f32 to vector<8x256xf32>
    %58 = arith.select %27, %56, %57 : vector<8x256xi1>, vector<8x256xf32>
    %c64 = arith.constant 64 : index
    %c0_38 = arith.constant 0 : index
    %59 = vector.load %arg6[%c64, %c0_38] : memref<73x256xf32, #tpu.memory_space<vmem>>, vector<8x256xf32>
    tpu.vector_store %arg6[%c64, %c0_38], %58 {strides = array<i32>} : memref<73x256xf32, #tpu.memory_space<vmem>>, vector<8x256xf32>,
    %c0_39 = arith.constant 0 : index
    %c0_40 = arith.constant 0 : index
    %60 = vector.load %arg2[%c0_39, %c0_40] : memref<8x73xf32, #tpu.memory_space<vmem>>, vector<8x73xf32>
    %c0_41 = arith.constant 0 : index
    %c0_42 = arith.constant 0 : index
    %61 = vector.load %arg6[%c0_41, %c0_42] : memref<73x256xf32, #tpu.memory_space<vmem>>, vector<73x256xf32>
    %cst_43 = arith.constant dense<0.000000e+00> : vector<8x256xf32>
    %62 = tpu.matmul %60, %61, %cst_43 {dimension_numbers = #tpu.dot_dimension_numbers<[1], [0], [0], [1], [0, 0, 1, 1], [], []>} : vector<8x73xf32>, vector<73x256xf32>, vector<8x256xf32> -> vector<8x256xf32>
    %cst_44 = arith.constant 0.000000e+00 : f32
    %63 = vector.broadcast %cst_44 : f32 to vector<8x256xf32>
    %64 = arith.cmpf ogt, %62, %63 : vector<8x256xf32>
    %cst_45 = arith.constant 0.000000e+00 : f32
    %65 = vector.broadcast %cst_45 : f32 to vector<8x256xf32>
    %66 = arith.mulf %65, %62 : vector<8x256xf32>
    %67 = arith.select %64, %62, %66 : vector<8x256xi1>, vector<8x256xf32>
    %c0_46 = arith.constant 0 : index
    %c128_47 = arith.constant 128 : index
    %68 = vector.load %arg5[%c0_46, %c128_47] : memref<8x512xf32, #tpu.memory_space<vmem>>, vector<8x256xf32>
    tpu.vector_store %arg5[%c0_46, %c128_47], %67 {strides = array<i32>} : memref<8x512xf32, #tpu.memory_space<vmem>>, vector<8x256xf32>,
    %c14_i32 = arith.constant 14 : i32
    %69 = vector.broadcast %c14_i32 : i32 to vector<8x256xi32>
    %70 = arith.cmpi slt, %22, %69 : vector<8x256xi32>
    %c2_i32 = arith.constant 2 : i32
    %71 = vector.broadcast %c2_i32 : i32 to vector<8x256xi32>
    %72 = arith.cmpi sge, %22, %71 : vector<8x256xi32>
    %c0_48 = arith.constant 0 : index
    %c94 = arith.constant 94 : index
    %73 = vector.load %arg5[%c0_48, %c94] : memref<8x512xf32, #tpu.memory_space<vmem>>, vector<8x256xf32>
    %cst_49 = arith.constant 0.000000e+00 : f32
    %74 = vector.broadcast %cst_49 : f32 to vector<8x256xf32>
    %75 = arith.select %72, %73, %74 : vector<8x256xi1>, vector<8x256xf32>
    %c0_50 = arith.constant 0 : index
    %c0_51 = arith.constant 0 : index
    %76 = vector.load %arg6[%c0_50, %c0_51] : memref<73x256xf32, #tpu.memory_space<vmem>>, vector<8x256xf32>
    tpu.vector_store %arg6[%c0_50, %c0_51], %75 {strides = array<i32>} : memref<73x256xf32, #tpu.memory_space<vmem>>, vector<8x256xf32>,
    %c0_52 = arith.constant 0 : index
    %c96 = arith.constant 96 : index
    %77 = vector.load %arg5[%c0_52, %c96] : memref<8x512xf32, #tpu.memory_space<vmem>>, vector<8x256xf32>
    %c8_53 = arith.constant 8 : index
    %c0_54 = arith.constant 0 : index
    %78 = vector.load %arg6[%c8_53, %c0_54] : memref<73x256xf32, #tpu.memory_space<vmem>>, vector<8x256xf32>
    tpu.vector_store %arg6[%c8_53, %c0_54], %77 {strides = array<i32>} : memref<73x256xf32, #tpu.memory_space<vmem>>, vector<8x256xf32>,
    %c0_55 = arith.constant 0 : index
    %c98 = arith.constant 98 : index
    %79 = vector.load %arg5[%c0_55, %c98] : memref<8x512xf32, #tpu.memory_space<vmem>>, vector<8x256xf32>
    %cst_56 = arith.constant 0.000000e+00 : f32
    %80 = vector.broadcast %cst_56 : f32 to vector<8x256xf32>
    %81 = arith.select %70, %79, %80 : vector<8x256xi1>, vector<8x256xf32>
    %c16_57 = arith.constant 16 : index
    %c0_58 = arith.constant 0 : index
    %82 = vector.load %arg6[%c16_57, %c0_58] : memref<73x256xf32, #tpu.memory_space<vmem>>, vector<8x256xf32>
    tpu.vector_store %arg6[%c16_57, %c0_58], %81 {strides = array<i32>} : memref<73x256xf32, #tpu.memory_space<vmem>>, vector<8x256xf32>,
    %c0_59 = arith.constant 0 : index
    %c126 = arith.constant 126 : index
    %83 = vector.load %arg5[%c0_59, %c126] : memref<8x512xf32, #tpu.memory_space<vmem>>, vector<8x256xf32>
    %cst_60 = arith.constant 0.000000e+00 : f32
    %84 = vector.broadcast %cst_60 : f32 to vector<8x256xf32>
    %85 = arith.select %72, %83, %84 : vector<8x256xi1>, vector<8x256xf32>
    %c24_61 = arith.constant 24 : index
    %c0_62 = arith.constant 0 : index
    %86 = vector.load %arg6[%c24_61, %c0_62] : memref<73x256xf32, #tpu.memory_space<vmem>>, vector<8x256xf32>
    tpu.vector_store %arg6[%c24_61, %c0_62], %85 {strides = array<i32>} : memref<73x256xf32, #tpu.memory_space<vmem>>, vector<8x256xf32>,
    %c0_63 = arith.constant 0 : index
    %c128_64 = arith.constant 128 : index
    %87 = vector.load %arg5[%c0_63, %c128_64] : memref<8x512xf32, #tpu.memory_space<vmem>>, vector<8x256xf32>
    %c32_65 = arith.constant 32 : index
    %c0_66 = arith.constant 0 : index
    %88 = vector.load %arg6[%c32_65, %c0_66] : memref<73x256xf32, #tpu.memory_space<vmem>>, vector<8x256xf32>
    tpu.vector_store %arg6[%c32_65, %c0_66], %87 {strides = array<i32>} : memref<73x256xf32, #tpu.memory_space<vmem>>, vector<8x256xf32>,
    %c0_67 = arith.constant 0 : index
    %c130 = arith.constant 130 : index
    %89 = vector.load %arg5[%c0_67, %c130] : memref<8x512xf32, #tpu.memory_space<vmem>>, vector<8x256xf32>
    %cst_68 = arith.constant 0.000000e+00 : f32
    %90 = vector.broadcast %cst_68 : f32 to vector<8x256xf32>
    %91 = arith.select %70, %89, %90 : vector<8x256xi1>, vector<8x256xf32>
    %c40_69 = arith.constant 40 : index
    %c0_70 = arith.constant 0 : index
    %92 = vector.load %arg6[%c40_69, %c0_70] : memref<73x256xf32, #tpu.memory_space<vmem>>, vector<8x256xf32>
    tpu.vector_store %arg6[%c40_69, %c0_70], %91 {strides = array<i32>} : memref<73x256xf32, #tpu.memory_space<vmem>>, vector<8x256xf32>,
    %c0_71 = arith.constant 0 : index
    %c158 = arith.constant 158 : index
    %93 = vector.load %arg5[%c0_71, %c158] : memref<8x512xf32, #tpu.memory_space<vmem>>, vector<8x256xf32>
    %cst_72 = arith.constant 0.000000e+00 : f32
    %94 = vector.broadcast %cst_72 : f32 to vector<8x256xf32>
    %95 = arith.select %72, %93, %94 : vector<8x256xi1>, vector<8x256xf32>
    %c48_73 = arith.constant 48 : index
    %c0_74 = arith.constant 0 : index
    %96 = vector.load %arg6[%c48_73, %c0_74] : memref<73x256xf32, #tpu.memory_space<vmem>>, vector<8x256xf32>
    tpu.vector_store %arg6[%c48_73, %c0_74], %95 {strides = array<i32>} : memref<73x256xf32, #tpu.memory_space<vmem>>, vector<8x256xf32>,
    %c0_75 = arith.constant 0 : index
    %c160 = arith.constant 160 : index
    %97 = vector.load %arg5[%c0_75, %c160] : memref<8x512xf32, #tpu.memory_space<vmem>>, vector<8x256xf32>
    %c56_76 = arith.constant 56 : index
    %c0_77 = arith.constant 0 : index
    %98 = vector.load %arg6[%c56_76, %c0_77] : memref<73x256xf32, #tpu.memory_space<vmem>>, vector<8x256xf32>
    tpu.vector_store %arg6[%c56_76, %c0_77], %97 {strides = array<i32>} : memref<73x256xf32, #tpu.memory_space<vmem>>, vector<8x256xf32>,
    %c0_78 = arith.constant 0 : index
    %c162 = arith.constant 162 : index
    %99 = vector.load %arg5[%c0_78, %c162] : memref<8x512xf32, #tpu.memory_space<vmem>>, vector<8x256xf32>
    %cst_79 = arith.constant 0.000000e+00 : f32
    %100 = vector.broadcast %cst_79 : f32 to vector<8x256xf32>
    %101 = arith.select %70, %99, %100 : vector<8x256xi1>, vector<8x256xf32>
    %c64_80 = arith.constant 64 : index
    %c0_81 = arith.constant 0 : index
    %102 = vector.load %arg6[%c64_80, %c0_81] : memref<73x256xf32, #tpu.memory_space<vmem>>, vector<8x256xf32>
    tpu.vector_store %arg6[%c64_80, %c0_81], %101 {strides = array<i32>} : memref<73x256xf32, #tpu.memory_space<vmem>>, vector<8x256xf32>,
    %c0_82 = arith.constant 0 : index
    %c0_83 = arith.constant 0 : index
    %103 = vector.load %arg3[%c0_82, %c0_83] : memref<8x73xf32, #tpu.memory_space<vmem>>, vector<8x73xf32>
    %c0_84 = arith.constant 0 : index
    %c0_85 = arith.constant 0 : index
    %104 = vector.load %arg6[%c0_84, %c0_85] : memref<73x256xf32, #tpu.memory_space<vmem>>, vector<73x256xf32>
    %cst_86 = arith.constant dense<0.000000e+00> : vector<8x256xf32>
    %105 = tpu.matmul %103, %104, %cst_86 {dimension_numbers = #tpu.dot_dimension_numbers<[1], [0], [0], [1], [0, 0, 1, 1], [], []>} : vector<8x73xf32>, vector<73x256xf32>, vector<8x256xf32> -> vector<8x256xf32>
    %106 = arith.addf %105, %24 : vector<8x256xf32>
    %c0_87 = arith.constant 0 : index
    %c0_88 = arith.constant 0 : index
    %c0_89 = arith.constant 0 : index
    %107 = vector.load %arg4[%c0_87, %c0_88, %c0_89] : memref<1x8x256xf32, #tpu.memory_space<vmem>>, vector<1x8x256xf32>
    %108 = vector.shape_cast %107 : vector<1x8x256xf32> to vector<8x256xf32>
    %109 = vector.shape_cast %106 : vector<8x256xf32> to vector<1x8x256xf32>
    tpu.vector_store %arg4[%c0_87, %c0_88, %c0_89], %109 {strides = array<i32>} : memref<1x8x256xf32, #tpu.memory_space<vmem>>, vector<1x8x256xf32>,
    return
  }
  func.func @transform_0(%arg0: i32) -> (i32, i32, i32) {
    %c0_i32 = arith.constant 0 : i32
    %c0_i32_0 = arith.constant 0 : i32
    %c0_i32_1 = arith.constant 0 : i32
    return %arg0, %c0_i32, %c0_i32_0 : i32, i32, i32
  }
  func.func @transform_1(%arg0: i32) -> (i32, i32) {
    %c0_i32 = arith.constant 0 : i32
    %c0_i32_0 = arith.constant 0 : i32
    %c0_i32_1 = arith.constant 0 : i32
    return %c0_i32, %c0_i32_0 : i32, i32
  }
  func.func @transform_2(%arg0: i32) -> (i32, i32) {
    %c0_i32 = arith.constant 0 : i32
    %c0_i32_0 = arith.constant 0 : i32
    %c0_i32_1 = arith.constant 0 : i32
    return %c0_i32, %c0_i32_0 : i32, i32
  }
  func.func @transform_3(%arg0: i32) -> (i32, i32, i32) {
    %c0_i32 = arith.constant 0 : i32
    %c0_i32_0 = arith.constant 0 : i32
    %c0_i32_1 = arith.constant 0 : i32
    return %arg0, %c0_i32, %c0_i32_0 : i32, i32, i32
  }
}

</mosaic_0001>

<llo_original>
// kernel: tpu_custom_call.1
$region0: #{tpu_custom_call.1}
  #allocation0 [shape = 'u32[]', space=smem, size = 0x4, offset = 0x4, fixed_abs, tag = 'smem constant byte address 0x4 - core index']
  #allocation1 [shape = 'u32[144,128]{1,0:T(1,128)}', space=vmem, size = 0x12000, scoped, tag = 'internal scratch']
  #allocation2 [shape = 'f32[8,512]{1,0:T(8,128)}', space=vmem, size = 0x4000, scoped, tag = 'scratch operand']
  #allocation3 [shape = 'f32[73,256]{1,0:T(8,128)}', space=vmem, size = 0x14000, scoped, tag = 'scratch operand']
  %s0 = inlined_call_operand.hbm [shape: f32[1,8,256], index: 0, kind: input, shape index: {}]
  %s1 = inlined_call_operand.hbm [shape: f32[8,73], index: 1, kind: input, shape index: {}]
  %s2 = inlined_call_operand.hbm [shape: f32[8,73], index: 2, kind: input, shape index: {}]
  %s3 = inlined_call_operand.hbm [shape: f32[1,8,256], index: 3, kind: output, shape index: {}]
  %s4 = sld [smem:[#allocation0]]
  $region34: #{tpu_custom_call.1} parent=0
    _
  %s6 = ssub.s32 1, %s4
  %s7 = scalar_select 0, %s6, %s4
  $region1: #{tpu_custom_call.1} parent=0
    #allocation4 [shape = 'u8[8192]{0}', space=vmem, size = 0x2000, scoped, tag = 'input window, operand 0, single buffered']
    #allocation5 [shape = 's32[1]{0}', space=sflag, size = 0x4, scoped, tag = 'scoped memory for tpu_custom_call.1']
    #allocation6 [shape = 's32[1]{0}', space=sflag, size = 0x4, scoped, tag = 'scoped memory for tpu_custom_call.1']
    #allocation7 [shape = 'u8[4096]{0}', space=vmem, size = 0x1000, scoped, tag = 'input window, operand 1, single buffered']
    #allocation8 [shape = 's32[1]{0}', space=sflag, size = 0x4, scoped, tag = 'scoped memory for tpu_custom_call.1']
    #allocation9 [shape = 'u8[4096]{0}', space=vmem, size = 0x1000, scoped, tag = 'input window, operand 2, single buffered']
    #allocation10 [shape = 'u8[8192]{0}', space=vmem, size = 0x2000, scoped, tag = 'output window, operand 0, single buffered']
    %8 = vsyncpa [#allocation5], 0
    %9 = vsyncpa [#allocation8], 0
    %10 = vsyncpa [#allocation6], 0
    // Predicated region
    $region2: #{tpu_custom_call.1} parent=1 // pred_check
      _
    $region3: #{tpu_custom_call.1} parent=1 // pred_check_branch
      %12 = sbr.rel (0) target = $region5
    $region4: #{tpu_custom_call.1} parent=1 // pred_region
      %s14 = ssub.s32 256, 256
      %15 = vsyncadd [#allocation5], %s14
      %s17 = sshll.u32 [#allocation4], 4
      %s18 = int_to_ptr.vmem [resolvable:$true] %s17
      %20 = dma.hbm_to_vmem [thread:$0]  %s0, 256, %s18, [#allocation5]
    $region5: #{tpu_custom_call.1} parent=1 // pred_fallthru
      _
    // Predicated region
    $region6: #{tpu_custom_call.1} parent=1 // pred_check
      _
    $region7: #{tpu_custom_call.1} parent=1 // pred_check_branch
      %22 = sbr.rel (0) target = $region9
    $region8: #{tpu_custom_call.1} parent=1 // pred_region
      %s24 = ssub.s32 128, 128
      %25 = vsyncadd [#allocation8], %s24
      %s27 = sshll.u32 [#allocation7], 4
      %s28 = int_to_ptr.vmem [resolvable:$true] %s27
      %30 = dma.hbm_to_vmem [thread:$0]  %s1, 128, %s28, [#allocation8]
    $region9: #{tpu_custom_call.1} parent=1 // pred_fallthru
      _
    // Predicated region
    $region10: #{tpu_custom_call.1} parent=1 // pred_check
      _
    $region11: #{tpu_custom_call.1} parent=1 // pred_check_branch
      %32 = sbr.rel (0) target = $region13
    $region12: #{tpu_custom_call.1} parent=1 // pred_region
      %s34 = ssub.s32 128, 128
      %35 = vsyncadd [#allocation8], %s34
      %s37 = sshll.u32 [#allocation9], 4
      %s38 = int_to_ptr.vmem [resolvable:$true] %s37
      %40 = dma.hbm_to_vmem [thread:$0]  %s2, 128, %s38, [#allocation8]
    $region13: #{tpu_custom_call.1} parent=1 // pred_fallthru
      _
    // Predicated region
    $region14: #{tpu_custom_call.1} parent=1 // pred_check
      _
    $region15: #{tpu_custom_call.1} parent=1 // pred_check_branch
      %42 = sbr.rel (0) target = $region17
    $region16: #{tpu_custom_call.1} parent=1 // pred_region
      %43 = dma.done [#allocation5], 256
    $region17: #{tpu_custom_call.1} parent=1 // pred_fallthru
      _
    // Predicated region
    $region18: #{tpu_custom_call.1} parent=1 // pred_check
      _
    $region19: #{tpu_custom_call.1} parent=1 // pred_check_branch
      %45 = sbr.rel (0) target = $region21
    $region20: #{tpu_custom_call.1} parent=1 // pred_region
      %46 = dma.done [#allocation8], 128
    $region21: #{tpu_custom_call.1} parent=1 // pred_fallthru
      _
    // Predicated region
    $region22: #{tpu_custom_call.1} parent=1 // pred_check
      _
    $region23: #{tpu_custom_call.1} parent=1 // pred_check_branch
      %48 = sbr.rel (0) target = $region25
    $region24: #{tpu_custom_call.1} parent=1 // pred_region
      %49 = dma.done [#allocation8], 128
    $region25: #{tpu_custom_call.1} parent=1 // pred_fallthru
      _
    %50 = vst [vmem:[#allocation2] sm:$0xff] 0.0
    %51 = vst [vmem:[#allocation2 + $0x18] sm:$0xff] 0.0
    %v52 = vlaneseq
    %vm53 = vcmp.ge.s32.totalorder %v52, 0
    %vm54 = vcmp.lt.s32.totalorder %v52, 256
    %vm55 = vmand %vm53, %vm54
    %s56 = scalar_lea.vmem [#allocation3], 144
    %57 = vst.msk [vmem:[%s56] ss:$8 sm:$0x3] %vm55, 1.0
    %58 = vst.msk [vmem:[%s56] ss:$8 sm:$0x0] %vm55, 1.0
    %v59 = vlaneseq
    %v60 = vand.u32 %v59, 127
    %v61 = vadd.s32 %v60, 128
    %vm62 = vcmp.lt.s32.totalorder %v60, 0
    %v63 = vsub.s32 0, %v60
    %v64 = vsel %vm62, %v63, %v60
    %v65 = vshrl.u32 %v64, 4
    %v66 = vand.u32 %v64, 15
    %v67 = vsub.s32 0, %v66
    %v68 = vsel %vm62, %v67, %v66
    %vm69 = vcmp.lt.s32.totalorder %v61, 0
    %v70 = vsub.s32 0, %v61
    %v71 = vsel %vm69, %v70, %v61
    %v72 = vshrl.u32 %v71, 4
    %v73 = vand.u32 %v71, 15
    %v74 = vsub.s32 0, %v73
    %v75 = vsel %vm69, %v74, %v73
    %vm76 = vcmp.ne.s32.totalorder %v68, 0
    %vm77 = vcmp.ne.s32.totalorder %v75, 0
    %vm78 = vcmp.lt.s32.totalorder %v68, 0
    %vm79 = vcmp.lt.s32.totalorder %v75, 0
    %vm80 = vmand %vm78, %vm76
    %vm81 = vmand %vm79, %vm77
    %v82 = vadd.s32 %v68, 16
    %v83 = vadd.s32 %v75, 16
    %v84 = vsel %vm80, %v82, %v68
    %v85 = vsel %vm81, %v83, %v75
    %v86 = vld [vmem:[#allocation4] sm:$0xff]
    %v87 = vld [vmem:[#allocation4 + $0x8] sm:$0xff]
    %88 = vst [vmem:[#allocation2 + $0x8] sm:$0xff] %v86
    %89 = vst [vmem:[#allocation2 + $0x10] sm:$0xff] %v87
    %vm90 = vcmp.lt.s32.totalorder %v84, 15
    %vm91 = vcmp.lt.s32.totalorder %v85, 15
    %vm92 = vcmp.ge.s32.totalorder %v84, 1
    %vm93 = vcmp.ge.s32.totalorder %v85, 1
    %v94 = vld [vmem:[#allocation2] sm:$0xff]
    %v95 = vld [vmem:[#allocation2 + $0x8] sm:$0xff]
    %v96 = vld [vmem:[#allocation2 + $0x10] sm:$0xff]
    %100 = vrot.lane.b32.xlu0 %v94, 17
    %v101 = vpop.permute.xlu0 %100
    %102 = vrot.lane.b32.xlu0 %v95, 17
    %v103 = vpop.permute.xlu0 %102
    %104 = vrot.lane.b32.xlu0 %v96, 17
    %v105 = vpop.permute.xlu0 %104
    %vm106 = vcmask 138240
    %v107 = vsel %vm106, %v101, %v103
    %v108 = vsel %vm106, %v103, %v105
    %v111 = vsel %vm92, %v107, 0.0
    %v112 = vsel %vm93, %v108, 0.0
    %113 = vst [vmem:[#allocation3] sm:$0xff] %v111
    %114 = vst [vmem:[#allocation3 + $0x8] sm:$0xff] %v112
    %v115 = vld [vmem:[#allocation2] sm:$0xff]
    %v116 = vld [vmem:[#allocation2 + $0x8] sm:$0xff]
    %v117 = vld [vmem:[#allocation2 + $0x10] sm:$0xff]
    %121 = vrot.lane.b32.xlu0 %v115, 16
    %v122 = vpop.permute.xlu0 %121
    %123 = vrot.lane.b32.xlu0 %v116, 16
    %v124 = vpop.permute.xlu0 %123
    %125 = vrot.lane.b32.xlu0 %v117, 16
    %v126 = vpop.permute.xlu0 %125
    %vm127 = vcmask 130048
    %v128 = vsel %vm127, %v122, %v124
    %v129 = vsel %vm127, %v124, %v126
    %132 = vst [vmem:[#allocation3 + $0x10] sm:$0xff] %v128
    %133 = vst [vmem:[#allocation3 + $0x18] sm:$0xff] %v129
    %v134 = vld [vmem:[#allocation2] sm:$0xff]
    %v135 = vld [vmem:[#allocation2 + $0x8] sm:$0xff]
    %v136 = vld [vmem:[#allocation2 + $0x10] sm:$0xff]
    %140 = vrot.lane.b32.xlu0 %v134, 15
    %v141 = vpop.permute.xlu0 %140
    %142 = vrot.lane.b32.xlu0 %v135, 15
    %v143 = vpop.permute.xlu0 %142
    %144 = vrot.lane.b32.xlu0 %v136, 15
    %v145 = vpop.permute.xlu0 %144
    %vm146 = vcmask 121856
    %v147 = vsel %vm146, %v141, %v143
    %v148 = vsel %vm146, %v143, %v145
    %v151 = vsel %vm90, %v147, 0.0
    %v152 = vsel %vm91, %v148, 0.0
    %153 = vst [vmem:[#allocation3 + $0x20] sm:$0xff] %v151
    %154 = vst [vmem:[#allocation3 + $0x28] sm:$0xff] %v152
    %v155 = vld [vmem:[#allocation2] sm:$0xff]
    %v156 = vld [vmem:[#allocation2 + $0x8] sm:$0xff]
    %v157 = vld [vmem:[#allocation2 + $0x10] sm:$0xff]
    %161 = vrot.lane.b32.xlu0 %v155, 1
    %v162 = vpop.permute.xlu0 %161
    %163 = vrot.lane.b32.xlu0 %v156, 1
    %v164 = vpop.permute.xlu0 %163
    %165 = vrot.lane.b32.xlu0 %v157, 1
    %v166 = vpop.permute.xlu0 %165
    %vm167 = vcmask 7168
    %v168 = vsel %vm167, %v162, %v164
    %v169 = vsel %vm167, %v164, %v166
    %v172 = vsel %vm92, %v168, 0.0
    %v173 = vsel %vm93, %v169, 0.0
    %174 = vst [vmem:[#allocation3 + $0x30] sm:$0xff] %v172
    %175 = vst [vmem:[#allocation3 + $0x38] sm:$0xff] %v173
    %v176 = vld [vmem:[#allocation2 + $0x8] sm:$0xff]
    %v177 = vld [vmem:[#allocation2 + $0x10] sm:$0xff]
    %178 = vst [vmem:[#allocation3 + $0x40] sm:$0xff] %v176
    %179 = vst [vmem:[#allocation3 + $0x48] sm:$0xff] %v177
    %v180 = vld [vmem:[#allocation2 + $0x8] sm:$0xff]
    %v181 = vld [vmem:[#allocation2 + $0x10] sm:$0xff]
    %v182 = vld [vmem:[#allocation2 + $0x18] sm:$0xff]
    %186 = vrot.lane.b32.xlu0 %v180, 127
    %v187 = vpop.permute.xlu0 %186
    %188 = vrot.lane.b32.xlu0 %v181, 127
    %v189 = vpop.permute.xlu0 %188
    %190 = vrot.lane.b32.xlu0 %v182, 127
    %v191 = vpop.permute.xlu0 %190
    %vm192 = vcmask 1039360
    %v193 = vsel %vm192, %v187, %v189
    %v194 = vsel %vm192, %v189, %v191
    %v197 = vsel %vm90, %v193, 0.0
    %v198 = vsel %vm91, %v194, 0.0
    %199 = vst [vmem:[#allocation3 + $0x50] sm:$0xff] %v197
    %200 = vst [vmem:[#allocation3 + $0x58] sm:$0xff] %v198
    %v201 = vld [vmem:[#allocation2 + $0x8] sm:$0xff]
    %v202 = vld [vmem:[#allocation2 + $0x10] sm:$0xff]
    %v203 = vld [vmem:[#allocation2 + $0x18] sm:$0xff]
    %207 = vrot.lane.b32.xlu0 %v201, 113
    %v208 = vpop.permute.xlu0 %207
    %209 = vrot.lane.b32.xlu0 %v202, 113
    %v210 = vpop.permute.xlu0 %209
    %211 = vrot.lane.b32.xlu0 %v203, 113
    %v212 = vpop.permute.xlu0 %211
    %vm213 = vcmask 924672
    %v214 = vsel %vm213, %v208, %v210
    %v215 = vsel %vm213, %v210, %v212
    %v218 = vsel %vm92, %v214, 0.0
    %v219 = vsel %vm93, %v215, 0.0
    %220 = vst [vmem:[#allocation3 + $0x60] sm:$0xff] %v218
    %221 = vst [vmem:[#allocation3 + $0x68] sm:$0xff] %v219
    %v222 = vld [vmem:[#allocation2 + $0x8] sm:$0xff]
    %v223 = vld [vmem:[#allocation2 + $0x10] sm:$0xff]
    %v224 = vld [vmem:[#allocation2 + $0x18] sm:$0xff]
    %228 = vrot.lane.b32.xlu0 %v222, 112
    %v229 = vpop.permute.xlu0 %228
    %230 = vrot.lane.b32.xlu0 %v223, 112
    %v231 = vpop.permute.xlu0 %230
    %232 = vrot.lane.b32.xlu0 %v224, 112
    %v233 = vpop.permute.xlu0 %232
    %vm234 = vcmask 916480
    %v235 = vsel %vm234, %v229, %v231
    %v236 = vsel %vm234, %v231, %v233
    %239 = vst [vmem:[#allocation3 + $0x70] sm:$0xff] %v235
    %240 = vst [vmem:[#allocation3 + $0x78] sm:$0xff] %v236
    %v241 = vld [vmem:[#allocation2 + $0x8] sm:$0xff]
    %v242 = vld [vmem:[#allocation2 + $0x10] sm:$0xff]
    %v243 = vld [vmem:[#allocation2 + $0x18] sm:$0xff]
    %247 = vrot.lane.b32.xlu0 %v241, 111
    %v248 = vpop.permute.xlu0 %247
    %249 = vrot.lane.b32.xlu0 %v242, 111
    %v250 = vpop.permute.xlu0 %249
    %251 = vrot.lane.b32.xlu0 %v243, 111
    %v252 = vpop.permute.xlu0 %251
    %vm253 = vcmask 908288
    %v254 = vsel %vm253, %v248, %v250
    %v255 = vsel %vm253, %v250, %v252
    %v258 = vsel %vm90, %v254, 0.0
    %v259 = vsel %vm91, %v255, 0.0
    %260 = vst [vmem:[#allocation3 + $0x80] sm:$0xff] %v258
    %261 = vst [vmem:[#allocation3 + $0x88] sm:$0xff] %v259
    %v262 = vld [vmem:[#allocation7] sm:$0xff]
    %v263 = vld [vmem:[#allocation3] sm:$0xff]
    %v264 = vld [vmem:[#allocation3 + $0x8] sm:$0xff]
    %v265 = vld [vmem:[#allocation3 + $0x10] sm:$0xff]
    %v266 = vld [vmem:[#allocation3 + $0x18] sm:$0xff]
    %v267 = vld [vmem:[#allocation3 + $0x20] sm:$0xff]
    %v268 = vld [vmem:[#allocation3 + $0x28] sm:$0xff]
    %v269 = vld [vmem:[#allocation3 + $0x30] sm:$0xff]
    %v270 = vld [vmem:[#allocation3 + $0x38] sm:$0xff]
    %v271 = vld [vmem:[#allocation3 + $0x40] sm:$0xff]
    %v272 = vld [vmem:[#allocation3 + $0x48] sm:$0xff]
    %v273 = vld [vmem:[#allocation3 + $0x50] sm:$0xff]
    %v274 = vld [vmem:[#allocation3 + $0x58] sm:$0xff]
    %v275 = vld [vmem:[#allocation3 + $0x60] sm:$0xff]
    %v276 = vld [vmem:[#allocation3 + $0x68] sm:$0xff]
    %v277 = vld [vmem:[#allocation3 + $0x70] sm:$0xff]
    %v278 = vld [vmem:[#allocation3 + $0x78] sm:$0xff]
    %v279 = vld [vmem:[#allocation3 + $0x80] sm:$0xff]
    %v280 = vld [vmem:[#allocation3 + $0x88] sm:$0xff]
    %v281 = vld [vmem:[#allocation3 + $0x90] sm:$0x1]
    %v282 = vld [vmem:[#allocation3 + $0x98] sm:$0x1]
    %vm283 = vcmask 596992
    %v285 = vsel %vm283, %v262, 0
    %vm287 = vcmask 1040384
    %v289 = vsel %vm287, %v281, 0
    %v292 = vsel %vm287, %v282, 0
    %294 = vmatprep.subr.mxu0 %v264
    %295 = vmatpush1.msra.mxu0 %v263
    %296 = vmatprep.subr.mxu0 %v266
    %297 = vmatpush1.msra.mxu0 %v265
    %298 = vmatprep.subr.mxu0 %v268
    %299 = vmatpush1.msra.mxu0 %v267
    %300 = vmatprep.subr.mxu0 %v270
    %301 = vmatpush1.msra.mxu0 %v269
    %302 = vmatprep.subr.mxu0 %v272
    %303 = vmatpush1.msra.mxu0 %v271
    %304 = vmatprep.subr.mxu0 %v274
    %305 = vmatpush1.msra.mxu0 %v273
    %306 = vmatprep.subr.mxu0 %v276
    %307 = vmatpush1.msra.mxu0 %v275
    %308 = vmatprep.subr.mxu0 %v278
    %309 = vmatpush1.msra.mxu0 %v277
    %310 = vmatprep.subr.mxu0 %v280
    %311 = vmatpush1.msra.mxu0 %v279
    %312 = vmatprep.subr.mxu0 %v292
    %313 = vmatpush1.msra.mxu0 %v289
    %314 = vmatprep.subr.mxu0 0.0
    %315 = vmatpush1.msra.mxu0 0.0
    %316 = vmatprep.subr.mxu0 0.0
    %317 = vmatpush1.msra.mxu0 0.0
    %318 = vmatprep.subr.mxu0 0.0
    %319 = vmatpush1.msra.mxu0 0.0
    %320 = vmatprep.subr.mxu0 0.0
    %321 = vmatpush1.msra.mxu0 0.0
    %322 = vmatprep.subr.mxu0 0.0
    %323 = vmatpush1.msra.mxu0 0.0
    %324 = vmatprep.subr.mxu0 0.0
    %325 = vmatpush1.msra.mxu0 0.0
    %326 = vmatprep.subr.mxu0 0.0
    %327 = vmatpush1.msra.mxu0 0.0
    %328 = vmatprep.subr.mxu0 0.0
    %329 = vmatpush1.msra.mxu0 0.0
    %330 = vmatprep.subr.mxu0 0.0
    %331 = vmatpush1.msra.mxu0 0.0
    %332 = vmatprep.subr.mxu0 0.0
    %333 = vmatpush1.msra.mxu0 0.0
    %334 = vmatprep.subr.mxu0 0.0
    %335 = vmatpush1.msra.mxu0 0.0
    %336 = vmatprep.subr.mxu0 0.0
    %337 = vmatpush1.msra.mxu0 0.0
    %338 = vmatprep.subr.mxu0 0.0
    %339 = vmatpush1.msra.mxu0 0.0
    %340 = vmatprep.subr.mxu0 0.0
    %341 = vmatpush1.msra.mxu0 0.0
    %342 = vmatprep.subr.mxu0 0.0
    %343 = vmatpush1.msra.mxu0 0.0
    %344 = vmatprep.subr.mxu0 0.0
    %345 = vmatpush1.msra.mxu0 0.0
    %346 = vmatprep.subr.mxu0 0.0
    %347 = vmatpush1.msra.mxu0 0.0
    %348 = vmatprep.subr.mxu0 0.0
    %349 = vmatpush1.msra.mxu0 0.0
    %350 = vmatprep.subr.mxu0 0.0
    %351 = vmatpush1.msra.mxu0 0.0
    %352 = vmatprep.subr.mxu0 0.0
    %353 = vmatpush1.msra.mxu0 0.0
    %354 = vmatprep.subr.mxu0 0.0
    %355 = vmatpush1.msra.mxu0 0.0
    %356 = vmatprep.subr.mxu0 0.0
    %357 = vmatpush1.msra.mxu0 0.0
    %358 = vmatprep.mubr.f32.mxu0 0.0
    %359 = vmatmul.mubr.f32.gmra.mrb[0].mxu0 %v285
    %v360 = vpop.f32.mrb[0].mxu0
    %v361 = vadd.f32 0.0, %v360
    %v362 = vpop.f32.mrb[0].mxu0
    %v363 = vadd.f32 0.0, %v362
    %364 = vdwg.mxu0
    %vm365 = vcmp.gt.f32.partialorder %v361, 0.0
    %vm366 = vcmp.gt.f32.partialorder %v363, 0.0
    %v367 = vmul.f32 %v361, 0.0
    %v368 = vmul.f32 %v363, 0.0
    %v369 = vsel %vm365, %v361, %v367
    %v370 = vsel %vm366, %v363, %v368
    %371 = vst [vmem:[#allocation2 + $0x8] sm:$0xff] %v369
    %372 = vst [vmem:[#allocation2 + $0x10] sm:$0xff] %v370
    %vm373 = vcmp.lt.s32.totalorder %v84, 14
    %vm374 = vcmp.lt.s32.totalorder %v85, 14
    %vm375 = vcmp.ge.s32.totalorder %v84, 2
    %vm376 = vcmp.ge.s32.totalorder %v85, 2
    %v377 = vld [vmem:[#allocation2] sm:$0xff]
    %v378 = vld [vmem:[#allocation2 + $0x8] sm:$0xff]
    %v379 = vld [vmem:[#allocation2 + $0x10] sm:$0xff]
    %383 = vrot.lane.b32.xlu0 %v377, 34
    %v384 = vpop.permute.xlu0 %383
    %385 = vrot.lane.b32.xlu0 %v378, 34
    %v386 = vpop.permute.xlu0 %385
    %387 = vrot.lane.b32.xlu0 %v379, 34
    %v388 = vpop.permute.xlu0 %387
    %vm389 = vcmask 277504
    %v390 = vsel %vm389, %v384, %v386
    %v391 = vsel %vm389, %v386, %v388
    %v394 = vsel %vm375, %v390, 0.0
    %v395 = vsel %vm376, %v391, 0.0
    %396 = vst [vmem:[#allocation3] sm:$0xff] %v394
    %397 = vst [vmem:[#allocation3 + $0x8] sm:$0xff] %v395
    %v398 = vld [vmem:[#allocation2] sm:$0xff]
    %v399 = vld [vmem:[#allocation2 + $0x8] sm:$0xff]
    %v400 = vld [vmem:[#allocation2 + $0x10] sm:$0xff]
    %404 = vrot.lane.b32.xlu0 %v398, 32
    %v405 = vpop.permute.xlu0 %404
    %406 = vrot.lane.b32.xlu0 %v399, 32
    %v407 = vpop.permute.xlu0 %406
    %408 = vrot.lane.b32.xlu0 %v400, 32
    %v409 = vpop.permute.xlu0 %408
    %vm410 = vcmask 261120
    %v411 = vsel %vm410, %v405, %v407
    %v412 = vsel %vm410, %v407, %v409
    %415 = vst [vmem:[#allocation3 + $0x10] sm:$0xff] %v411
    %416 = vst [vmem:[#allocation3 + $0x18] sm:$0xff] %v412
    %v417 = vld [vmem:[#allocation2] sm:$0xff]
    %v418 = vld [vmem:[#allocation2 + $0x8] sm:$0xff]
    %v419 = vld [vmem:[#allocation2 + $0x10] sm:$0xff]
    %423 = vrot.lane.b32.xlu0 %v417, 30
    %v424 = vpop.permute.xlu0 %423
    %425 = vrot.lane.b32.xlu0 %v418, 30
    %v426 = vpop.permute.xlu0 %425
    %427 = vrot.lane.b32.xlu0 %v419, 30
    %v428 = vpop.permute.xlu0 %427
    %vm429 = vcmask 244736
    %v430 = vsel %vm429, %v424, %v426
    %v431 = vsel %vm429, %v426, %v428
    %v434 = vsel %vm373, %v430, 0.0
    %v435 = vsel %vm374, %v431, 0.0
    %436 = vst [vmem:[#allocation3 + $0x20] sm:$0xff] %v434
    %437 = vst [vmem:[#allocation3 + $0x28] sm:$0xff] %v435
    %v438 = vld [vmem:[#allocation2] sm:$0xff]
    %v439 = vld [vmem:[#allocation2 + $0x8] sm:$0xff]
    %v440 = vld [vmem:[#allocation2 + $0x10] sm:$0xff]
    %444 = vrot.lane.b32.xlu0 %v438, 2
    %v445 = vpop.permute.xlu0 %444
    %446 = vrot.lane.b32.xlu0 %v439, 2
    %v447 = vpop.permute.xlu0 %446
    %448 = vrot.lane.b32.xlu0 %v440, 2
    %v449 = vpop.permute.xlu0 %448
    %vm450 = vcmask 15360
    %v451 = vsel %vm450, %v445, %v447
    %v452 = vsel %vm450, %v447, %v449
    %v455 = vsel %vm375, %v451, 0.0
    %v456 = vsel %vm376, %v452, 0.0
    %457 = vst [vmem:[#allocation3 + $0x30] sm:$0xff] %v455
    %458 = vst [vmem:[#allocation3 + $0x38] sm:$0xff] %v456
    %v459 = vld [vmem:[#allocation2 + $0x8] sm:$0xff]
    %v460 = vld [vmem:[#allocation2 + $0x10] sm:$0xff]
    %461 = vst [vmem:[#allocation3 + $0x40] sm:$0xff] %v459
    %462 = vst [vmem:[#allocation3 + $0x48] sm:$0xff] %v460
    %v463 = vld [vmem:[#allocation2 + $0x8] sm:$0xff]
    %v464 = vld [vmem:[#allocation2 + $0x10] sm:$0xff]
    %v465 = vld [vmem:[#allocation2 + $0x18] sm:$0xff]
    %469 = vrot.lane.b32.xlu0 %v463, 126
    %v470 = vpop.permute.xlu0 %469
    %471 = vrot.lane.b32.xlu0 %v464, 126
    %v472 = vpop.permute.xlu0 %471
    %473 = vrot.lane.b32.xlu0 %v465, 126
    %v474 = vpop.permute.xlu0 %473
    %vm475 = vcmask 1031168
    %v476 = vsel %vm475, %v470, %v472
    %v477 = vsel %vm475, %v472, %v474
    %v480 = vsel %vm373, %v476, 0.0
    %v481 = vsel %vm374, %v477, 0.0
    %482 = vst [vmem:[#allocation3 + $0x50] sm:$0xff] %v480
    %483 = vst [vmem:[#allocation3 + $0x58] sm:$0xff] %v481
    %v484 = vld [vmem:[#allocation2 + $0x8] sm:$0xff]
    %v485 = vld [vmem:[#allocation2 + $0x10] sm:$0xff]
    %v486 = vld [vmem:[#allocation2 + $0x18] sm:$0xff]
    %490 = vrot.lane.b32.xlu0 %v484, 98
    %v491 = vpop.permute.xlu0 %490
    %492 = vrot.lane.b32.xlu0 %v485, 98
    %v493 = vpop.permute.xlu0 %492
    %494 = vrot.lane.b32.xlu0 %v486, 98
    %v495 = vpop.permute.xlu0 %494
    %vm496 = vcmask 801792
    %v497 = vsel %vm496, %v491, %v493
    %v498 = vsel %vm496, %v493, %v495
    %v501 = vsel %vm375, %v497, 0.0
    %v502 = vsel %vm376, %v498, 0.0
    %503 = vst [vmem:[#allocation3 + $0x60] sm:$0xff] %v501
    %504 = vst [vmem:[#allocation3 + $0x68] sm:$0xff] %v502
    %v505 = vld [vmem:[#allocation2 + $0x8] sm:$0xff]
    %v506 = vld [vmem:[#allocation2 + $0x10] sm:$0xff]
    %v507 = vld [vmem:[#allocation2 + $0x18] sm:$0xff]
    %511 = vrot.lane.b32.xlu0 %v505, 96
    %v512 = vpop.permute.xlu0 %511
    %513 = vrot.lane.b32.xlu0 %v506, 96
    %v514 = vpop.permute.xlu0 %513
    %515 = vrot.lane.b32.xlu0 %v507, 96
    %v516 = vpop.permute.xlu0 %515
    %vm517 = vcmask 785408
    %v518 = vsel %vm517, %v512, %v514
    %v519 = vsel %vm517, %v514, %v516
    %522 = vst [vmem:[#allocation3 + $0x70] sm:$0xff] %v518
    %523 = vst [vmem:[#allocation3 + $0x78] sm:$0xff] %v519
    %v524 = vld [vmem:[#allocation2 + $0x8] sm:$0xff]
    %v525 = vld [vmem:[#allocation2 + $0x10] sm:$0xff]
    %v526 = vld [vmem:[#allocation2 + $0x18] sm:$0xff]
    %530 = vrot.lane.b32.xlu0 %v524, 94
    %v531 = vpop.permute.xlu0 %530
    %532 = vrot.lane.b32.xlu0 %v525, 94
    %v533 = vpop.permute.xlu0 %532
    %534 = vrot.lane.b32.xlu0 %v526, 94
    %v535 = vpop.permute.xlu0 %534
    %vm536 = vcmask 769024
    %v537 = vsel %vm536, %v531, %v533
    %v538 = vsel %vm536, %v533, %v535
    %v541 = vsel %vm373, %v537, 0.0
    %v542 = vsel %vm374, %v538, 0.0
    %543 = vst [vmem:[#allocation3 + $0x80] sm:$0xff] %v541
    %544 = vst [vmem:[#allocation3 + $0x88] sm:$0xff] %v542
    %v545 = vld [vmem:[#allocation9] sm:$0xff]
    %v546 = vld [vmem:[#allocation3] sm:$0xff]
    %v547 = vld [vmem:[#allocation3 + $0x8] sm:$0xff]
    %v548 = vld [vmem:[#allocation3 + $0x10] sm:$0xff]
    %v549 = vld [vmem:[#allocation3 + $0x18] sm:$0xff]
    %v550 = vld [vmem:[#allocation3 + $0x20] sm:$0xff]
    %v551 = vld [vmem:[#allocation3 + $0x28] sm:$0xff]
    %v552 = vld [vmem:[#allocation3 + $0x30] sm:$0xff]
    %v553 = vld [vmem:[#allocation3 + $0x38] sm:$0xff]
    %v554 = vld [vmem:[#allocation3 + $0x40] sm:$0xff]
    %v555 = vld [vmem:[#allocation3 + $0x48] sm:$0xff]
    %v556 = vld [vmem:[#allocation3 + $0x50] sm:$0xff]
    %v557 = vld [vmem:[#allocation3 + $0x58] sm:$0xff]
    %v558 = vld [vmem:[#allocation3 + $0x60] sm:$0xff]
    %v559 = vld [vmem:[#allocation3 + $0x68] sm:$0xff]
    %v560 = vld [vmem:[#allocation3 + $0x70] sm:$0xff]
    %v561 = vld [vmem:[#allocation3 + $0x78] sm:$0xff]
    %v562 = vld [vmem:[#allocation3 + $0x80] sm:$0xff]
    %v563 = vld [vmem:[#allocation3 + $0x88] sm:$0xff]
    %v564 = vld [vmem:[#allocation3 + $0x90] sm:$0x1]
    %v565 = vld [vmem:[#allocation3 + $0x98] sm:$0x1]
    %v567 = vsel %vm283, %v545, 0
    %v570 = vsel %vm287, %v564, 0
    %v573 = vsel %vm287, %v565, 0
    %575 = vmatprep.subr.mxu0 %v547
    %576 = vmatpush1.msra.mxu0 %v546
    %577 = vmatprep.subr.mxu0 %v549
    %578 = vmatpush1.msra.mxu0 %v548
    %579 = vmatprep.subr.mxu0 %v551
    %580 = vmatpush1.msra.mxu0 %v550
    %581 = vmatprep.subr.mxu0 %v553
    %582 = vmatpush1.msra.mxu0 %v552
    %583 = vmatprep.subr.mxu0 %v555
    %584 = vmatpush1.msra.mxu0 %v554
    %585 = vmatprep.subr.mxu0 %v557
    %586 = vmatpush1.msra.mxu0 %v556
    %587 = vmatprep.subr.mxu0 %v559
    %588 = vmatpush1.msra.mxu0 %v558
    %589 = vmatprep.subr.mxu0 %v561
    %590 = vmatpush1.msra.mxu0 %v560
    %591 = vmatprep.subr.mxu0 %v563
    %592 = vmatpush1.msra.mxu0 %v562
    %593 = vmatprep.subr.mxu0 %v573
    %594 = vmatpush1.msra.mxu0 %v570
    %595 = vmatprep.subr.mxu0 0.0
    %596 = vmatpush1.msra.mxu0 0.0
    %597 = vmatprep.subr.mxu0 0.0
    %598 = vmatpush1.msra.mxu0 0.0
    %599 = vmatprep.subr.mxu0 0.0
    %600 = vmatpush1.msra.mxu0 0.0
    %601 = vmatprep.subr.mxu0 0.0
    %602 = vmatpush1.msra.mxu0 0.0
    %603 = vmatprep.subr.mxu0 0.0
    %604 = vmatpush1.msra.mxu0 0.0
    %605 = vmatprep.subr.mxu0 0.0
    %606 = vmatpush1.msra.mxu0 0.0
    %607 = vmatprep.subr.mxu0 0.0
    %608 = vmatpush1.msra.mxu0 0.0
    %609 = vmatprep.subr.mxu0 0.0
    %610 = vmatpush1.msra.mxu0 0.0
    %611 = vmatprep.subr.mxu0 0.0
    %612 = vmatpush1.msra.mxu0 0.0
    %613 = vmatprep.subr.mxu0 0.0
    %614 = vmatpush1.msra.mxu0 0.0
    %615 = vmatprep.subr.mxu0 0.0
    %616 = vmatpush1.msra.mxu0 0.0
    %617 = vmatprep.subr.mxu0 0.0
    %618 = vmatpush1.msra.mxu0 0.0
    %619 = vmatprep.subr.mxu0 0.0
    %620 = vmatpush1.msra.mxu0 0.0
    %621 = vmatprep.subr.mxu0 0.0
    %622 = vmatpush1.msra.mxu0 0.0
    %623 = vmatprep.subr.mxu0 0.0
    %624 = vmatpush1.msra.mxu0 0.0
    %625 = vmatprep.subr.mxu0 0.0
    %626 = vmatpush1.msra.mxu0 0.0
    %627 = vmatprep.subr.mxu0 0.0
    %628 = vmatpush1.msra.mxu0 0.0
    %629 = vmatprep.subr.mxu0 0.0
    %630 = vmatpush1.msra.mxu0 0.0
    %631 = vmatprep.subr.mxu0 0.0
    %632 = vmatpush1.msra.mxu0 0.0
    %633 = vmatprep.subr.mxu0 0.0
    %634 = vmatpush1.msra.mxu0 0.0
    %635 = vmatprep.subr.mxu0 0.0
    %636 = vmatpush1.msra.mxu0 0.0
    %637 = vmatprep.subr.mxu0 0.0
    %638 = vmatpush1.msra.mxu0 0.0
    %639 = vmatprep.mubr.f32.mxu0 0.0
    %640 = vmatmul.mubr.f32.gmra.mrb[0].mxu0 %v567
    %v641 = vpop.f32.mrb[0].mxu0
    %v642 = vadd.f32 %v86, %v641
    %v643 = vpop.f32.mrb[0].mxu0
    %v644 = vadd.f32 %v87, %v643
    %645 = vdwg.mxu0
    %646 = vst [vmem:[#allocation10] sm:$0xff] %v642
    %647 = vst [vmem:[#allocation10 + $0x8] sm:$0xff] %v644
    // Predicated region
    $region26: #{tpu_custom_call.1} parent=1 // pred_check
      _
    $region27: #{tpu_custom_call.1} parent=1 // pred_check_branch
      %649 = sbr.rel (0) target = $region29
    $region28: #{tpu_custom_call.1} parent=1 // pred_region
      %s651 = ssub.s32 256, 256
      %652 = vsyncadd [#allocation6], %s651
      %s654 = sshll.u32 [#allocation10], 4
      %s655 = int_to_ptr.vmem [resolvable:$true] %s654
      %657 = dma.vmem_to_hbm [thread:$0]  %s655, 256, %s3, [#allocation6]
    $region29: #{tpu_custom_call.1} parent=1 // pred_fallthru
      _
    // Predicated region
    $region30: #{tpu_custom_call.1} parent=1 // pred_check
      _
    $region31: #{tpu_custom_call.1} parent=1 // pred_check_branch
      %659 = sbr.rel (0) target = $region33
    $region32: #{tpu_custom_call.1} parent=1 // pred_region
      %660 = dma.done [#allocation6], 256
    $region33: #{tpu_custom_call.1} parent=1 // pred_fallthru
      _
    %661 = vsyncpa [#allocation5], 1
    %662 = vsyncpa [#allocation8], 1
    %663 = vsyncpa [#allocation6], 1

</llo_original>
